<compile_context>
chip_gen: v5e
topology: v5e:2x2
jax: 0.10.0
libtpu: 0.0.40
codegen_flags: <defaults>
</compile_context>

<pallas_src>
import math

import jax
import jax.numpy as jnp
from jax import lax
from jax.experimental import pallas as pl
from jax.experimental.pallas import tpu as pltpu

INPUT_DIM = 8
OUTPUT_DIM = 16
NUM_HEADS = 8
HEAD_DIM = OUTPUT_DIM // NUM_HEADS
BATCH = 2
SEQ = 3
BS = BATCH * SEQ


def attn_kernel(x_ref, wqkv_ref, wo_ref, o_ref):
    """Fused self-attention forward for all BATCH*SEQ rows.

    x_ref:    (BS, INPUT_DIM)
    wqkv_ref: (INPUT_DIM + 1, 3*OUTPUT_DIM)  fused [Wq*scale | Wk | Wv], columns
              in dim-major / head-minor order (column d*H + h <-> head h, dim d);
              last row is the fused (scaled) bias.
    wo_ref:   (OUTPUT_DIM + 1, OUTPUT_DIM)   W_o rows permuted to the same
              dim-major order; last row is b_o.
    o_ref:    (BS, OUTPUT_DIM)
    """
    H, HD = NUM_HEADS, HEAD_DIM
    x = x_ref[...]
    w = wqkv_ref[...]

    # Fused QKV projection as INPUT_DIM broadcasted FMAs on the VPU (exact
    # f32; the contraction is only 8 long so the MXU buys nothing here and a
    # tiny matmul's result-FIFO drain is pure overhead on v5e/v6e).  The bias
    # row seeds the accumulator, so no separate bias buffer / add is needed.
    qkv = x[:, 0:1] * w[0:1, :] + w[INPUT_DIM:INPUT_DIM + 1, :]
    for d in range(1, INPUT_DIM):
        qkv = qkv + x[:, d:d + 1] * w[d:d + 1, :]

    # Contiguous (BS, H) planes: q_d / k_d / v_d hold dim `d` of every head.
    qs = [qkv[:, (0 * HD + d) * H:(0 * HD + d + 1) * H] for d in range(HD)]
    ks = [qkv[:, (1 * HD + d) * H:(1 * HD + d + 1) * H] for d in range(HD)]
    vs = [qkv[:, (2 * HD + d) * H:(2 * HD + d + 1) * H] for d in range(HD)]

    # Key index along sublanes; reused by every query row's batch mask
    # (no (BS,BS) mask input, no integer division needed).
    key_idx = lax.broadcasted_iota(jnp.int32, (BS, H), 0)

    # Per-query-row attention.  Everything stays 2-D (keys on sublanes, heads
    # on lanes): no lane relayouts, no batched micro-matmuls, no (H,BS,BS)
    # tensor.  The loop is static and tiny (BS = 6).
    o_rows = [[] for _ in range(HD)]
    for i in range(BS):
        lo = (i // SEQ) * SEQ                                 # static window
        valid = (key_idx >= lo) & (key_idx < lo + SEQ)

        s_i = qs[0][i:i + 1, :] * ks[0]
        for d in range(1, HD):
            s_i = s_i + qs[d][i:i + 1, :] * ks[d]             # (BS, H)

        m_i = jnp.max(s_i, axis=0, keepdims=True)             # shift only
        e_i = jnp.where(valid, jnp.exp(s_i - m_i), 0.0)       # mask on e
        den = jnp.sum(e_i, axis=0, keepdims=True)
        p_i = e_i / den                                       # exact recip

        for d in range(HD):
            o_rows[d].append(jnp.sum(p_i * vs[d], axis=0, keepdims=True))

    o_d = [jnp.concatenate(rows, axis=0) for rows in o_rows]  # HD x (BS, H)

    # Output projection + bias, again as broadcasted FMAs (contraction = 16).
    wo = wo_ref[...]
    out = wo[HD * H:HD * H + 1, :]                            # b_o row
    for d in range(HD):
        for h in range(H):
            r = d * H + h
            out = out + o_d[d][:, h:h + 1] * wo[r:r + 1, :]

    o_ref[...] = out.astype(o_ref.dtype)


def _pack_params(params):
    """Fold scale + biases and permute weights to the kernel's dim-major layout."""
    HD = HEAD_DIM
    scale = 1.0 / math.sqrt(HD)

    def dim_major_cols(w):
        # column d*H + h of the result <- column h*HD + d of the input
        return jnp.concatenate([w[:, d::HD] for d in range(HD)], axis=1)

    w_qkv = jnp.concatenate([dim_major_cols(params["wq"] * scale),
                             dim_major_cols(params["wk"]),
                             dim_major_cols(params["wv"])], axis=1)
    b_qkv = jnp.concatenate([dim_major_cols(params["bq"] * scale),
                             dim_major_cols(params["bk"]),
                             dim_major_cols(params["bv"])], axis=1)
    w_qkv = jnp.concatenate([w_qkv, b_qkv], axis=0)            # (D_in+1, 3*D_out)

    wo_rows = jnp.concatenate([params["wo"][d::HD, :] for d in range(HD)], axis=0)
    wo_aug = jnp.concatenate([wo_rows, params["bo"]], axis=0)  # (D_out+1, D_out)
    return w_qkv, wo_aug


def self_attention(x, params):
    B, S, d_in = x.shape
    d_out = params["wo"].shape[1]
    bs = B * S

    w_qkv, wo_aug = _pack_params(params)
    x2 = x.reshape(bs, d_in)

    vmem = pl.BlockSpec(memory_space=pltpu.MemorySpace.VMEM)
    flops = (2 * bs * d_in * 3 * d_out            # QKV projection
             + 4 * bs * bs * OUTPUT_DIM           # scores + weighted values
             + 2 * bs * d_out * d_out)            # output projection
    cost = pl.CostEstimate(
        flops=flops,
        transcendentals=bs * bs * NUM_HEADS,
        bytes_accessed=4 * (x2.size + w_qkv.size + wo_aug.size + bs * d_out))

    out2 = pl.pallas_call(
        attn_kernel,
        out_shape=jax.ShapeDtypeStruct((bs, d_out), x.dtype),
        in_specs=[vmem, vmem, vmem],
        out_specs=vmem,
        cost_estimate=cost,
    )(x2, w_qkv, wo_aug)

    return out2.reshape(B, S, d_out)


def reference_forward(x, params):
    """Pure-JAX mirror of the PyTorch forward, evaluated at full f32 precision."""
    P = jax.lax.Precision.HIGHEST
    B, S, _ = x.shape
    q = jnp.matmul(x, params["wq"], precision=P) + params["bq"][0]
    k = jnp.matmul(x, params["wk"], precision=P) + params["bk"][0]
    v = jnp.matmul(x, params["wv"], precision=P) + params["bv"][0]
    q = q.reshape(B, S, NUM_HEADS, HEAD_DIM).transpose(0, 2, 1, 3)
    k = k.reshape(B, S, NUM_HEADS, HEAD_DIM).transpose(0, 2, 3, 1)
    v = v.reshape(B, S, NUM_HEADS, HEAD_DIM).transpose(0, 2, 1, 3)
    a = jax.nn.softmax(jnp.matmul(q, k, precision=P) / math.sqrt(HEAD_DIM), axis=-1)
    o = jnp.matmul(a, v, precision=P).transpose(0, 2, 1, 3).reshape(B, S, OUTPUT_DIM)
    return jnp.matmul(o, params["wo"], precision=P) + params["bo"][0]


def init_params(key):
    ks = jax.random.split(key, 8)
    scale_in = 1.0 / math.sqrt(INPUT_DIM)
    scale_out = 1.0 / math.sqrt(OUTPUT_DIM)
    return {
        "wq": jax.random.normal(ks[0], (INPUT_DIM, OUTPUT_DIM), jnp.float32) * scale_in,
        "bq": jax.random.normal(ks[1], (1, OUTPUT_DIM), jnp.float32) * 0.1,
        "wk": jax.random.normal(ks[2], (INPUT_DIM, OUTPUT_DIM), jnp.float32) * scale_in,
        "bk": jax.random.normal(ks[3], (1, OUTPUT_DIM), jnp.float32) * 0.1,
        "wv": jax.random.normal(ks[4], (INPUT_DIM, OUTPUT_DIM), jnp.float32) * scale_in,
        "bv": jax.random.normal(ks[5], (1, OUTPUT_DIM), jnp.float32) * 0.1,
        "wo": jax.random.normal(ks[6], (OUTPUT_DIM, OUTPUT_DIM), jnp.float32) * scale_out,
        "bo": jax.random.normal(ks[7], (1, OUTPUT_DIM), jnp.float32) * 0.1,
    }


if __name__ == "__main__":
    key = jax.random.PRNGKey(0)
    k_x, k_p = jax.random.split(key)
    x = jax.random.normal(k_x, (BATCH, SEQ, INPUT_DIM), jnp.float32)
    params = init_params(k_p)

    out = self_attention(x, params)
    out = jax.block_until_ready(out)

    ref = reference_forward(x, params)
    assert out.shape == (BATCH, SEQ, OUTPUT_DIM)
    max_err = float(jnp.max(jnp.abs(out - ref)))
    assert jnp.allclose(out, ref, rtol=1e-3, atol=1e-3), (
        f"mismatch vs reference (max abs err {max_err})")

    print("KERNEL_OK")
</pallas_src>

<mosaic_0001>
module attributes {stable_mosaic.version = 11 : i64} {
  func.func @attn_kernel(%arg0: memref<6x8xf32, #tpu.memory_space<vmem>>, %arg1: memref<9x48xf32, #tpu.memory_space<vmem>>, %arg2: memref<17x16xf32, #tpu.memory_space<vmem>>, %arg3: memref<6x16xf32, #tpu.memory_space<vmem>>) attributes {dimension_semantics = [], scalar_prefetch = 0 : i64, scratch_operands = 0 : i64, tpu.core_type = #tpu.core_type<tc>} {
    %c0 = arith.constant 0 : index
    %c0_0 = arith.constant 0 : index
    %0 = vector.load %arg0[%c0, %c0_0] : memref<6x8xf32, #tpu.memory_space<vmem>>, vector<6x8xf32>
    %c0_1 = arith.constant 0 : index
    %c0_2 = arith.constant 0 : index
    %1 = vector.load %arg1[%c0_1, %c0_2] : memref<9x48xf32, #tpu.memory_space<vmem>>, vector<9x48xf32>
    %2 = vector.extract_strided_slice %0 {offsets = [0, 0], sizes = [6, 1], strides = [1, 1]} : vector<6x8xf32> to vector<6x1xf32>
    %3 = vector.extract_strided_slice %1 {offsets = [0, 0], sizes = [1, 48], strides = [1, 1]} : vector<9x48xf32> to vector<1x48xf32>
    %4 = vector.broadcast %2 : vector<6x1xf32> to vector<6x48xf32>
    %5 = vector.broadcast %3 : vector<1x48xf32> to vector<6x48xf32>
    %6 = arith.mulf %4, %5 : vector<6x48xf32>
    %7 = vector.extract_strided_slice %1 {offsets = [8, 0], sizes = [1, 48], strides = [1, 1]} : vector<9x48xf32> to vector<1x48xf32>
    %8 = vector.broadcast %7 : vector<1x48xf32> to vector<6x48xf32>
    %9 = arith.addf %6, %8 : vector<6x48xf32>
    %10 = vector.extract_strided_slice %0 {offsets = [0, 1], sizes = [6, 1], strides = [1, 1]} : vector<6x8xf32> to vector<6x1xf32>
    %11 = vector.extract_strided_slice %1 {offsets = [1, 0], sizes = [1, 48], strides = [1, 1]} : vector<9x48xf32> to vector<1x48xf32>
    %12 = vector.broadcast %10 : vector<6x1xf32> to vector<6x48xf32>
    %13 = vector.broadcast %11 : vector<1x48xf32> to vector<6x48xf32>
    %14 = arith.mulf %12, %13 : vector<6x48xf32>
    %15 = arith.addf %9, %14 : vector<6x48xf32>
    %16 = vector.extract_strided_slice %0 {offsets = [0, 2], sizes = [6, 1], strides = [1, 1]} : vector<6x8xf32> to vector<6x1xf32>
    %17 = vector.extract_strided_slice %1 {offsets = [2, 0], sizes = [1, 48], strides = [1, 1]} : vector<9x48xf32> to vector<1x48xf32>
    %18 = vector.broadcast %16 : vector<6x1xf32> to vector<6x48xf32>
    %19 = vector.broadcast %17 : vector<1x48xf32> to vector<6x48xf32>
    %20 = arith.mulf %18, %19 : vector<6x48xf32>
    %21 = arith.addf %15, %20 : vector<6x48xf32>
    %22 = vector.extract_strided_slice %0 {offsets = [0, 3], sizes = [6, 1], strides = [1, 1]} : vector<6x8xf32> to vector<6x1xf32>
    %23 = vector.extract_strided_slice %1 {offsets = [3, 0], sizes = [1, 48], strides = [1, 1]} : vector<9x48xf32> to vector<1x48xf32>
    %24 = vector.broadcast %22 : vector<6x1xf32> to vector<6x48xf32>
    %25 = vector.broadcast %23 : vector<1x48xf32> to vector<6x48xf32>
    %26 = arith.mulf %24, %25 : vector<6x48xf32>
    %27 = arith.addf %21, %26 : vector<6x48xf32>
    %28 = vector.extract_strided_slice %0 {offsets = [0, 4], sizes = [6, 1], strides = [1, 1]} : vector<6x8xf32> to vector<6x1xf32>
    %29 = vector.extract_strided_slice %1 {offsets = [4, 0], sizes = [1, 48], strides = [1, 1]} : vector<9x48xf32> to vector<1x48xf32>
    %30 = vector.broadcast %28 : vector<6x1xf32> to vector<6x48xf32>
    %31 = vector.broadcast %29 : vector<1x48xf32> to vector<6x48xf32>
    %32 = arith.mulf %30, %31 : vector<6x48xf32>
    %33 = arith.addf %27, %32 : vector<6x48xf32>
    %34 = vector.extract_strided_slice %0 {offsets = [0, 5], sizes = [6, 1], strides = [1, 1]} : vector<6x8xf32> to vector<6x1xf32>
    %35 = vector.extract_strided_slice %1 {offsets = [5, 0], sizes = [1, 48], strides = [1, 1]} : vector<9x48xf32> to vector<1x48xf32>
    %36 = vector.broadcast %34 : vector<6x1xf32> to vector<6x48xf32>
    %37 = vector.broadcast %35 : vector<1x48xf32> to vector<6x48xf32>
    %38 = arith.mulf %36, %37 : vector<6x48xf32>
    %39 = arith.addf %33, %38 : vector<6x48xf32>
    %40 = vector.extract_strided_slice %0 {offsets = [0, 6], sizes = [6, 1], strides = [1, 1]} : vector<6x8xf32> to vector<6x1xf32>
    %41 = vector.extract_strided_slice %1 {offsets = [6, 0], sizes = [1, 48], strides = [1, 1]} : vector<9x48xf32> to vector<1x48xf32>
    %42 = vector.broadcast %40 : vector<6x1xf32> to vector<6x48xf32>
    %43 = vector.broadcast %41 : vector<1x48xf32> to vector<6x48xf32>
    %44 = arith.mulf %42, %43 : vector<6x48xf32>
    %45 = arith.addf %39, %44 : vector<6x48xf32>
    %46 = vector.extract_strided_slice %0 {offsets = [0, 7], sizes = [6, 1], strides = [1, 1]} : vector<6x8xf32> to vector<6x1xf32>
    %47 = vector.extract_strided_slice %1 {offsets = [7, 0], sizes = [1, 48], strides = [1, 1]} : vector<9x48xf32> to vector<1x48xf32>
    %48 = vector.broadcast %46 : vector<6x1xf32> to vector<6x48xf32>
    %49 = vector.broadcast %47 : vector<1x48xf32> to vector<6x48xf32>
    %50 = arith.mulf %48, %49 : vector<6x48xf32>
    %51 = arith.addf %45, %50 : vector<6x48xf32>
    %52 = vector.extract_strided_slice %51 {offsets = [0, 0], sizes = [6, 8], strides = [1, 1]} : vector<6x48xf32> to vector<6x8xf32>
    %53 = vector.extract_strided_slice %51 {offsets = [0, 8], sizes = [6, 8], strides = [1, 1]} : vector<6x48xf32> to vector<6x8xf32>
    %54 = vector.extract_strided_slice %51 {offsets = [0, 16], sizes = [6, 8], strides = [1, 1]} : vector<6x48xf32> to vector<6x8xf32>
    %55 = vector.extract_strided_slice %51 {offsets = [0, 24], sizes = [6, 8], strides = [1, 1]} : vector<6x48xf32> to vector<6x8xf32>
    %56 = vector.extract_strided_slice %51 {offsets = [0, 32], sizes = [6, 8], strides = [1, 1]} : vector<6x48xf32> to vector<6x8xf32>
    %57 = vector.extract_strided_slice %51 {offsets = [0, 40], sizes = [6, 8], strides = [1, 1]} : vector<6x48xf32> to vector<6x8xf32>
    %58 = tpu.iota {dimensions = array<i32: 0>} : vector<6x8xi32>
    %c0_i32 = arith.constant 0 : i32
    %59 = vector.broadcast %c0_i32 : i32 to vector<6x8xi32>
    %60 = arith.cmpi sge, %58, %59 : vector<6x8xi32>
    %c3_i32 = arith.constant 3 : i32
    %61 = vector.broadcast %c3_i32 : i32 to vector<6x8xi32>
    %62 = arith.cmpi slt, %58, %61 : vector<6x8xi32>
    %63 = arith.andi %60, %62 : vector<6x8xi1>
    %64 = vector.extract_strided_slice %52 {offsets = [0, 0], sizes = [1, 8], strides = [1, 1]} : vector<6x8xf32> to vector<1x8xf32>
    %65 = vector.broadcast %64 : vector<1x8xf32> to vector<6x8xf32>
    %66 = arith.mulf %65, %54 : vector<6x8xf32>
    %67 = vector.extract_strided_slice %53 {offsets = [0, 0], sizes = [1, 8], strides = [1, 1]} : vector<6x8xf32> to vector<1x8xf32>
    %68 = vector.broadcast %67 : vector<1x8xf32> to vector<6x8xf32>
    %69 = arith.mulf %68, %55 : vector<6x8xf32>
    %70 = arith.addf %66, %69 : vector<6x8xf32>
    %cst = arith.constant dense<0xFF800000> : vector<8xf32>
    %71 = vector.multi_reduction <maximumf>, %70, %cst [0] : vector<6x8xf32> to vector<8xf32>
    %72 = vector.shape_cast %71 : vector<8xf32> to vector<1x8xf32>
    %73 = vector.broadcast %72 : vector<1x8xf32> to vector<6x8xf32>
    %74 = arith.subf %70, %73 : vector<6x8xf32>
    %75 = math.exp %74 : vector<6x8xf32>
    %cst_3 = arith.constant 0.000000e+00 : f32
    %76 = vector.broadcast %cst_3 : f32 to vector<6x8xf32>
    %77 = arith.select %63, %75, %76 : vector<6x8xi1>, vector<6x8xf32>
    %cst_4 = arith.constant dense<0.000000e+00> : vector<8xf32>
    %78 = vector.multi_reduction <add>, %77, %cst_4 [0] : vector<6x8xf32> to vector<8xf32>
    %79 = vector.shape_cast %78 : vector<8xf32> to vector<1x8xf32>
    %80 = vector.broadcast %79 : vector<1x8xf32> to vector<6x8xf32>
    %81 = arith.divf %77, %80 : vector<6x8xf32>
    %82 = arith.mulf %81, %56 : vector<6x8xf32>
    %cst_5 = arith.constant dense<0.000000e+00> : vector<8xf32>
    %83 = vector.multi_reduction <add>, %82, %cst_5 [0] : vector<6x8xf32> to vector<8xf32>
    %84 = vector.shape_cast %83 : vector<8xf32> to vector<1x8xf32>
    %85 = arith.mulf %81, %57 : vector<6x8xf32>
    %cst_6 = arith.constant dense<0.000000e+00> : vector<8xf32>
    %86 = vector.multi_reduction <add>, %85, %cst_6 [0] : vector<6x8xf32> to vector<8xf32>
    %87 = vector.shape_cast %86 : vector<8xf32> to vector<1x8xf32>
    %c0_i32_7 = arith.constant 0 : i32
    %88 = vector.broadcast %c0_i32_7 : i32 to vector<6x8xi32>
    %89 = arith.cmpi sge, %58, %88 : vector<6x8xi32>
    %c3_i32_8 = arith.constant 3 : i32
    %90 = vector.broadcast %c3_i32_8 : i32 to vector<6x8xi32>
    %91 = arith.cmpi slt, %58, %90 : vector<6x8xi32>
    %92 = arith.andi %89, %91 : vector<6x8xi1>
    %93 = vector.extract_strided_slice %52 {offsets = [1, 0], sizes = [1, 8], strides = [1, 1]} : vector<6x8xf32> to vector<1x8xf32>
    %94 = vector.broadcast %93 : vector<1x8xf32> to vector<6x8xf32>
    %95 = arith.mulf %94, %54 : vector<6x8xf32>
    %96 = vector.extract_strided_slice %53 {offsets = [1, 0], sizes = [1, 8], strides = [1, 1]} : vector<6x8xf32> to vector<1x8xf32>
    %97 = vector.broadcast %96 : vector<1x8xf32> to vector<6x8xf32>
    %98 = arith.mulf %97, %55 : vector<6x8xf32>
    %99 = arith.addf %95, %98 : vector<6x8xf32>
    %cst_9 = arith.constant dense<0xFF800000> : vector<8xf32>
    %100 = vector.multi_reduction <maximumf>, %99, %cst_9 [0] : vector<6x8xf32> to vector<8xf32>
    %101 = vector.shape_cast %100 : vector<8xf32> to vector<1x8xf32>
    %102 = vector.broadcast %101 : vector<1x8xf32> to vector<6x8xf32>
    %103 = arith.subf %99, %102 : vector<6x8xf32>
    %104 = math.exp %103 : vector<6x8xf32>
    %cst_10 = arith.constant 0.000000e+00 : f32
    %105 = vector.broadcast %cst_10 : f32 to vector<6x8xf32>
    %106 = arith.select %92, %104, %105 : vector<6x8xi1>, vector<6x8xf32>
    %cst_11 = arith.constant dense<0.000000e+00> : vector<8xf32>
    %107 = vector.multi_reduction <add>, %106, %cst_11 [0] : vector<6x8xf32> to vector<8xf32>
    %108 = vector.shape_cast %107 : vector<8xf32> to vector<1x8xf32>
    %109 = vector.broadcast %108 : vector<1x8xf32> to vector<6x8xf32>
    %110 = arith.divf %106, %109 : vector<6x8xf32>
    %111 = arith.mulf %110, %56 : vector<6x8xf32>
    %cst_12 = arith.constant dense<0.000000e+00> : vector<8xf32>
    %112 = vector.multi_reduction <add>, %111, %cst_12 [0] : vector<6x8xf32> to vector<8xf32>
    %113 = vector.shape_cast %112 : vector<8xf32> to vector<1x8xf32>
    %114 = arith.mulf %110, %57 : vector<6x8xf32>
    %cst_13 = arith.constant dense<0.000000e+00> : vector<8xf32>
    %115 = vector.multi_reduction <add>, %114, %cst_13 [0] : vector<6x8xf32> to vector<8xf32>
    %116 = vector.shape_cast %115 : vector<8xf32> to vector<1x8xf32>
    %c0_i32_14 = arith.constant 0 : i32
    %117 = vector.broadcast %c0_i32_14 : i32 to vector<6x8xi32>
    %118 = arith.cmpi sge, %58, %117 : vector<6x8xi32>
    %c3_i32_15 = arith.constant 3 : i32
    %119 = vector.broadcast %c3_i32_15 : i32 to vector<6x8xi32>
    %120 = arith.cmpi slt, %58, %119 : vector<6x8xi32>
    %121 = arith.andi %118, %120 : vector<6x8xi1>
    %122 = vector.extract_strided_slice %52 {offsets = [2, 0], sizes = [1, 8], strides = [1, 1]} : vector<6x8xf32> to vector<1x8xf32>
    %123 = vector.broadcast %122 : vector<1x8xf32> to vector<6x8xf32>
    %124 = arith.mulf %123, %54 : vector<6x8xf32>
    %125 = vector.extract_strided_slice %53 {offsets = [2, 0], sizes = [1, 8], strides = [1, 1]} : vector<6x8xf32> to vector<1x8xf32>
    %126 = vector.broadcast %125 : vector<1x8xf32> to vector<6x8xf32>
    %127 = arith.mulf %126, %55 : vector<6x8xf32>
    %128 = arith.addf %124, %127 : vector<6x8xf32>
    %cst_16 = arith.constant dense<0xFF800000> : vector<8xf32>
    %129 = vector.multi_reduction <maximumf>, %128, %cst_16 [0] : vector<6x8xf32> to vector<8xf32>
    %130 = vector.shape_cast %129 : vector<8xf32> to vector<1x8xf32>
    %131 = vector.broadcast %130 : vector<1x8xf32> to vector<6x8xf32>
    %132 = arith.subf %128, %131 : vector<6x8xf32>
    %133 = math.exp %132 : vector<6x8xf32>
    %cst_17 = arith.constant 0.000000e+00 : f32
    %134 = vector.broadcast %cst_17 : f32 to vector<6x8xf32>
    %135 = arith.select %121, %133, %134 : vector<6x8xi1>, vector<6x8xf32>
    %cst_18 = arith.constant dense<0.000000e+00> : vector<8xf32>
    %136 = vector.multi_reduction <add>, %135, %cst_18 [0] : vector<6x8xf32> to vector<8xf32>
    %137 = vector.shape_cast %136 : vector<8xf32> to vector<1x8xf32>
    %138 = vector.broadcast %137 : vector<1x8xf32> to vector<6x8xf32>
    %139 = arith.divf %135, %138 : vector<6x8xf32>
    %140 = arith.mulf %139, %56 : vector<6x8xf32>
    %cst_19 = arith.constant dense<0.000000e+00> : vector<8xf32>
    %141 = vector.multi_reduction <add>, %140, %cst_19 [0] : vector<6x8xf32> to vector<8xf32>
    %142 = vector.shape_cast %141 : vector<8xf32> to vector<1x8xf32>
    %143 = arith.mulf %139, %57 : vector<6x8xf32>
    %cst_20 = arith.constant dense<0.000000e+00> : vector<8xf32>
    %144 = vector.multi_reduction <add>, %143, %cst_20 [0] : vector<6x8xf32> to vector<8xf32>
    %145 = vector.shape_cast %144 : vector<8xf32> to vector<1x8xf32>
    %c3_i32_21 = arith.constant 3 : i32
    %146 = vector.broadcast %c3_i32_21 : i32 to vector<6x8xi32>
    %147 = arith.cmpi sge, %58, %146 : vector<6x8xi32>
    %c6_i32 = arith.constant 6 : i32
    %148 = vector.broadcast %c6_i32 : i32 to vector<6x8xi32>
    %149 = arith.cmpi slt, %58, %148 : vector<6x8xi32>
    %150 = arith.andi %147, %149 : vector<6x8xi1>
    %151 = vector.extract_strided_slice %52 {offsets = [3, 0], sizes = [1, 8], strides = [1, 1]} : vector<6x8xf32> to vector<1x8xf32>
    %152 = vector.broadcast %151 : vector<1x8xf32> to vector<6x8xf32>
    %153 = arith.mulf %152, %54 : vector<6x8xf32>
    %154 = vector.extract_strided_slice %53 {offsets = [3, 0], sizes = [1, 8], strides = [1, 1]} : vector<6x8xf32> to vector<1x8xf32>
    %155 = vector.broadcast %154 : vector<1x8xf32> to vector<6x8xf32>
    %156 = arith.mulf %155, %55 : vector<6x8xf32>
    %157 = arith.addf %153, %156 : vector<6x8xf32>
    %cst_22 = arith.constant dense<0xFF800000> : vector<8xf32>
    %158 = vector.multi_reduction <maximumf>, %157, %cst_22 [0] : vector<6x8xf32> to vector<8xf32>
    %159 = vector.shape_cast %158 : vector<8xf32> to vector<1x8xf32>
    %160 = vector.broadcast %159 : vector<1x8xf32> to vector<6x8xf32>
    %161 = arith.subf %157, %160 : vector<6x8xf32>
    %162 = math.exp %161 : vector<6x8xf32>
    %cst_23 = arith.constant 0.000000e+00 : f32
    %163 = vector.broadcast %cst_23 : f32 to vector<6x8xf32>
    %164 = arith.select %150, %162, %163 : vector<6x8xi1>, vector<6x8xf32>
    %cst_24 = arith.constant dense<0.000000e+00> : vector<8xf32>
    %165 = vector.multi_reduction <add>, %164, %cst_24 [0] : vector<6x8xf32> to vector<8xf32>
    %166 = vector.shape_cast %165 : vector<8xf32> to vector<1x8xf32>
    %167 = vector.broadcast %166 : vector<1x8xf32> to vector<6x8xf32>
    %168 = arith.divf %164, %167 : vector<6x8xf32>
    %169 = arith.mulf %168, %56 : vector<6x8xf32>
    %cst_25 = arith.constant dense<0.000000e+00> : vector<8xf32>
    %170 = vector.multi_reduction <add>, %169, %cst_25 [0] : vector<6x8xf32> to vector<8xf32>
    %171 = vector.shape_cast %170 : vector<8xf32> to vector<1x8xf32>
    %172 = arith.mulf %168, %57 : vector<6x8xf32>
    %cst_26 = arith.constant dense<0.000000e+00> : vector<8xf32>
    %173 = vector.multi_reduction <add>, %172, %cst_26 [0] : vector<6x8xf32> to vector<8xf32>
    %174 = vector.shape_cast %173 : vector<8xf32> to vector<1x8xf32>
    %c3_i32_27 = arith.constant 3 : i32
    %175 = vector.broadcast %c3_i32_27 : i32 to vector<6x8xi32>
    %176 = arith.cmpi sge, %58, %175 : vector<6x8xi32>
    %c6_i32_28 = arith.constant 6 : i32
    %177 = vector.broadcast %c6_i32_28 : i32 to vector<6x8xi32>
    %178 = arith.cmpi slt, %58, %177 : vector<6x8xi32>
    %179 = arith.andi %176, %178 : vector<6x8xi1>
    %180 = vector.extract_strided_slice %52 {offsets = [4, 0], sizes = [1, 8], strides = [1, 1]} : vector<6x8xf32> to vector<1x8xf32>
    %181 = vector.broadcast %180 : vector<1x8xf32> to vector<6x8xf32>
    %182 = arith.mulf %181, %54 : vector<6x8xf32>
    %183 = vector.extract_strided_slice %53 {offsets = [4, 0], sizes = [1, 8], strides = [1, 1]} : vector<6x8xf32> to vector<1x8xf32>
    %184 = vector.broadcast %183 : vector<1x8xf32> to vector<6x8xf32>
    %185 = arith.mulf %184, %55 : vector<6x8xf32>
    %186 = arith.addf %182, %185 : vector<6x8xf32>
    %cst_29 = arith.constant dense<0xFF800000> : vector<8xf32>
    %187 = vector.multi_reduction <maximumf>, %186, %cst_29 [0] : vector<6x8xf32> to vector<8xf32>
    %188 = vector.shape_cast %187 : vector<8xf32> to vector<1x8xf32>
    %189 = vector.broadcast %188 : vector<1x8xf32> to vector<6x8xf32>
    %190 = arith.subf %186, %189 : vector<6x8xf32>
    %191 = math.exp %190 : vector<6x8xf32>
    %cst_30 = arith.constant 0.000000e+00 : f32
    %192 = vector.broadcast %cst_30 : f32 to vector<6x8xf32>
    %193 = arith.select %179, %191, %192 : vector<6x8xi1>, vector<6x8xf32>
    %cst_31 = arith.constant dense<0.000000e+00> : vector<8xf32>
    %194 = vector.multi_reduction <add>, %193, %cst_31 [0] : vector<6x8xf32> to vector<8xf32>
    %195 = vector.shape_cast %194 : vector<8xf32> to vector<1x8xf32>
    %196 = vector.broadcast %195 : vector<1x8xf32> to vector<6x8xf32>
    %197 = arith.divf %193, %196 : vector<6x8xf32>
    %198 = arith.mulf %197, %56 : vector<6x8xf32>
    %cst_32 = arith.constant dense<0.000000e+00> : vector<8xf32>
    %199 = vector.multi_reduction <add>, %198, %cst_32 [0] : vector<6x8xf32> to vector<8xf32>
    %200 = vector.shape_cast %199 : vector<8xf32> to vector<1x8xf32>
    %201 = arith.mulf %197, %57 : vector<6x8xf32>
    %cst_33 = arith.constant dense<0.000000e+00> : vector<8xf32>
    %202 = vector.multi_reduction <add>, %201, %cst_33 [0] : vector<6x8xf32> to vector<8xf32>
    %203 = vector.shape_cast %202 : vector<8xf32> to vector<1x8xf32>
    %c3_i32_34 = arith.constant 3 : i32
    %204 = vector.broadcast %c3_i32_34 : i32 to vector<6x8xi32>
    %205 = arith.cmpi sge, %58, %204 : vector<6x8xi32>
    %c6_i32_35 = arith.constant 6 : i32
    %206 = vector.broadcast %c6_i32_35 : i32 to vector<6x8xi32>
    %207 = arith.cmpi slt, %58, %206 : vector<6x8xi32>
    %208 = arith.andi %205, %207 : vector<6x8xi1>
    %209 = vector.extract_strided_slice %52 {offsets = [5, 0], sizes = [1, 8], strides = [1, 1]} : vector<6x8xf32> to vector<1x8xf32>
    %210 = vector.broadcast %209 : vector<1x8xf32> to vector<6x8xf32>
    %211 = arith.mulf %210, %54 : vector<6x8xf32>
    %212 = vector.extract_strided_slice %53 {offsets = [5, 0], sizes = [1, 8], strides = [1, 1]} : vector<6x8xf32> to vector<1x8xf32>
    %213 = vector.broadcast %212 : vector<1x8xf32> to vector<6x8xf32>
    %214 = arith.mulf %213, %55 : vector<6x8xf32>
    %215 = arith.addf %211, %214 : vector<6x8xf32>
    %cst_36 = arith.constant dense<0xFF800000> : vector<8xf32>
    %216 = vector.multi_reduction <maximumf>, %215, %cst_36 [0] : vector<6x8xf32> to vector<8xf32>
    %217 = vector.shape_cast %216 : vector<8xf32> to vector<1x8xf32>
    %218 = vector.broadcast %217 : vector<1x8xf32> to vector<6x8xf32>
    %219 = arith.subf %215, %218 : vector<6x8xf32>
    %220 = math.exp %219 : vector<6x8xf32>
    %cst_37 = arith.constant 0.000000e+00 : f32
    %221 = vector.broadcast %cst_37 : f32 to vector<6x8xf32>
    %222 = arith.select %208, %220, %221 : vector<6x8xi1>, vector<6x8xf32>
    %cst_38 = arith.constant dense<0.000000e+00> : vector<8xf32>
    %223 = vector.multi_reduction <add>, %222, %cst_38 [0] : vector<6x8xf32> to vector<8xf32>
    %224 = vector.shape_cast %223 : vector<8xf32> to vector<1x8xf32>
    %225 = vector.broadcast %224 : vector<1x8xf32> to vector<6x8xf32>
    %226 = arith.divf %222, %225 : vector<6x8xf32>
    %227 = arith.mulf %226, %56 : vector<6x8xf32>
    %cst_39 = arith.constant dense<0.000000e+00> : vector<8xf32>
    %228 = vector.multi_reduction <add>, %227, %cst_39 [0] : vector<6x8xf32> to vector<8xf32>
    %229 = vector.shape_cast %228 : vector<8xf32> to vector<1x8xf32>
    %230 = arith.mulf %226, %57 : vector<6x8xf32>
    %cst_40 = arith.constant dense<0.000000e+00> : vector<8xf32>
    %231 = vector.multi_reduction <add>, %230, %cst_40 [0] : vector<6x8xf32> to vector<8xf32>
    %232 = vector.shape_cast %231 : vector<8xf32> to vector<1x8xf32>
    %233 = tpu.concatenate %84, %113, %142, %171, %200, %229 in 0 : vector<1x8xf32>, vector<1x8xf32>, vector<1x8xf32>, vector<1x8xf32>, vector<1x8xf32>, vector<1x8xf32> -> vector<6x8xf32>
    %234 = tpu.concatenate %87, %116, %145, %174, %203, %232 in 0 : vector<1x8xf32>, vector<1x8xf32>, vector<1x8xf32>, vector<1x8xf32>, vector<1x8xf32>, vector<1x8xf32> -> vector<6x8xf32>
    %c0_41 = arith.constant 0 : index
    %c0_42 = arith.constant 0 : index
    %235 = vector.load %arg2[%c0_41, %c0_42] : memref<17x16xf32, #tpu.memory_space<vmem>>, vector<17x16xf32>
    %236 = vector.extract_strided_slice %235 {offsets = [16, 0], sizes = [1, 16], strides = [1, 1]} : vector<17x16xf32> to vector<1x16xf32>
    %237 = vector.extract_strided_slice %233 {offsets = [0, 0], sizes = [6, 1], strides = [1, 1]} : vector<6x8xf32> to vector<6x1xf32>
    %238 = vector.extract_strided_slice %235 {offsets = [0, 0], sizes = [1, 16], strides = [1, 1]} : vector<17x16xf32> to vector<1x16xf32>
    %239 = vector.broadcast %237 : vector<6x1xf32> to vector<6x16xf32>
    %240 = vector.broadcast %238 : vector<1x16xf32> to vector<6x16xf32>
    %241 = arith.mulf %239, %240 : vector<6x16xf32>
    %242 = vector.broadcast %236 : vector<1x16xf32> to vector<6x16xf32>
    %243 = arith.addf %242, %241 : vector<6x16xf32>
    %244 = vector.extract_strided_slice %233 {offsets = [0, 1], sizes = [6, 1], strides = [1, 1]} : vector<6x8xf32> to vector<6x1xf32>
    %245 = vector.extract_strided_slice %235 {offsets = [1, 0], sizes = [1, 16], strides = [1, 1]} : vector<17x16xf32> to vector<1x16xf32>
    %246 = vector.broadcast %244 : vector<6x1xf32> to vector<6x16xf32>
    %247 = vector.broadcast %245 : vector<1x16xf32> to vector<6x16xf32>
    %248 = arith.mulf %246, %247 : vector<6x16xf32>
    %249 = arith.addf %243, %248 : vector<6x16xf32>
    %250 = vector.extract_strided_slice %233 {offsets = [0, 2], sizes = [6, 1], strides = [1, 1]} : vector<6x8xf32> to vector<6x1xf32>
    %251 = vector.extract_strided_slice %235 {offsets = [2, 0], sizes = [1, 16], strides = [1, 1]} : vector<17x16xf32> to vector<1x16xf32>
    %252 = vector.broadcast %250 : vector<6x1xf32> to vector<6x16xf32>
    %253 = vector.broadcast %251 : vector<1x16xf32> to vector<6x16xf32>
    %254 = arith.mulf %252, %253 : vector<6x16xf32>
    %255 = arith.addf %249, %254 : vector<6x16xf32>
    %256 = vector.extract_strided_slice %233 {offsets = [0, 3], sizes = [6, 1], strides = [1, 1]} : vector<6x8xf32> to vector<6x1xf32>
    %257 = vector.extract_strided_slice %235 {offsets = [3, 0], sizes = [1, 16], strides = [1, 1]} : vector<17x16xf32> to vector<1x16xf32>
    %258 = vector.broadcast %256 : vector<6x1xf32> to vector<6x16xf32>
    %259 = vector.broadcast %257 : vector<1x16xf32> to vector<6x16xf32>
    %260 = arith.mulf %258, %259 : vector<6x16xf32>
    %261 = arith.addf %255, %260 : vector<6x16xf32>
    %262 = vector.extract_strided_slice %233 {offsets = [0, 4], sizes = [6, 1], strides = [1, 1]} : vector<6x8xf32> to vector<6x1xf32>
    %263 = vector.extract_strided_slice %235 {offsets = [4, 0], sizes = [1, 16], strides = [1, 1]} : vector<17x16xf32> to vector<1x16xf32>
    %264 = vector.broadcast %262 : vector<6x1xf32> to vector<6x16xf32>
    %265 = vector.broadcast %263 : vector<1x16xf32> to vector<6x16xf32>
    %266 = arith.mulf %264, %265 : vector<6x16xf32>
    %267 = arith.addf %261, %266 : vector<6x16xf32>
    %268 = vector.extract_strided_slice %233 {offsets = [0, 5], sizes = [6, 1], strides = [1, 1]} : vector<6x8xf32> to vector<6x1xf32>
    %269 = vector.extract_strided_slice %235 {offsets = [5, 0], sizes = [1, 16], strides = [1, 1]} : vector<17x16xf32> to vector<1x16xf32>
    %270 = vector.broadcast %268 : vector<6x1xf32> to vector<6x16xf32>
    %271 = vector.broadcast %269 : vector<1x16xf32> to vector<6x16xf32>
    %272 = arith.mulf %270, %271 : vector<6x16xf32>
    %273 = arith.addf %267, %272 : vector<6x16xf32>
    %274 = vector.extract_strided_slice %233 {offsets = [0, 6], sizes = [6, 1], strides = [1, 1]} : vector<6x8xf32> to vector<6x1xf32>
    %275 = vector.extract_strided_slice %235 {offsets = [6, 0], sizes = [1, 16], strides = [1, 1]} : vector<17x16xf32> to vector<1x16xf32>
    %276 = vector.broadcast %274 : vector<6x1xf32> to vector<6x16xf32>
    %277 = vector.broadcast %275 : vector<1x16xf32> to vector<6x16xf32>
    %278 = arith.mulf %276, %277 : vector<6x16xf32>
    %279 = arith.addf %273, %278 : vector<6x16xf32>
    %280 = vector.extract_strided_slice %233 {offsets = [0, 7], sizes = [6, 1], strides = [1, 1]} : vector<6x8xf32> to vector<6x1xf32>
    %281 = vector.extract_strided_slice %235 {offsets = [7, 0], sizes = [1, 16], strides = [1, 1]} : vector<17x16xf32> to vector<1x16xf32>
    %282 = vector.broadcast %280 : vector<6x1xf32> to vector<6x16xf32>
    %283 = vector.broadcast %281 : vector<1x16xf32> to vector<6x16xf32>
    %284 = arith.mulf %282, %283 : vector<6x16xf32>
    %285 = arith.addf %279, %284 : vector<6x16xf32>
    %286 = vector.extract_strided_slice %234 {offsets = [0, 0], sizes = [6, 1], strides = [1, 1]} : vector<6x8xf32> to vector<6x1xf32>
    %287 = vector.extract_strided_slice %235 {offsets = [8, 0], sizes = [1, 16], strides = [1, 1]} : vector<17x16xf32> to vector<1x16xf32>
    %288 = vector.broadcast %286 : vector<6x1xf32> to vector<6x16xf32>
    %289 = vector.broadcast %287 : vector<1x16xf32> to vector<6x16xf32>
    %290 = arith.mulf %288, %289 : vector<6x16xf32>
    %291 = arith.addf %285, %290 : vector<6x16xf32>
    %292 = vector.extract_strided_slice %234 {offsets = [0, 1], sizes = [6, 1], strides = [1, 1]} : vector<6x8xf32> to vector<6x1xf32>
    %293 = vector.extract_strided_slice %235 {offsets = [9, 0], sizes = [1, 16], strides = [1, 1]} : vector<17x16xf32> to vector<1x16xf32>
    %294 = vector.broadcast %292 : vector<6x1xf32> to vector<6x16xf32>
    %295 = vector.broadcast %293 : vector<1x16xf32> to vector<6x16xf32>
    %296 = arith.mulf %294, %295 : vector<6x16xf32>
    %297 = arith.addf %291, %296 : vector<6x16xf32>
    %298 = vector.extract_strided_slice %234 {offsets = [0, 2], sizes = [6, 1], strides = [1, 1]} : vector<6x8xf32> to vector<6x1xf32>
    %299 = vector.extract_strided_slice %235 {offsets = [10, 0], sizes = [1, 16], strides = [1, 1]} : vector<17x16xf32> to vector<1x16xf32>
    %300 = vector.broadcast %298 : vector<6x1xf32> to vector<6x16xf32>
    %301 = vector.broadcast %299 : vector<1x16xf32> to vector<6x16xf32>
    %302 = arith.mulf %300, %301 : vector<6x16xf32>
    %303 = arith.addf %297, %302 : vector<6x16xf32>
    %304 = vector.extract_strided_slice %234 {offsets = [0, 3], sizes = [6, 1], strides = [1, 1]} : vector<6x8xf32> to vector<6x1xf32>
    %305 = vector.extract_strided_slice %235 {offsets = [11, 0], sizes = [1, 16], strides = [1, 1]} : vector<17x16xf32> to vector<1x16xf32>
    %306 = vector.broadcast %304 : vector<6x1xf32> to vector<6x16xf32>
    %307 = vector.broadcast %305 : vector<1x16xf32> to vector<6x16xf32>
    %308 = arith.mulf %306, %307 : vector<6x16xf32>
    %309 = arith.addf %303, %308 : vector<6x16xf32>
    %310 = vector.extract_strided_slice %234 {offsets = [0, 4], sizes = [6, 1], strides = [1, 1]} : vector<6x8xf32> to vector<6x1xf32>
    %311 = vector.extract_strided_slice %235 {offsets = [12, 0], sizes = [1, 16], strides = [1, 1]} : vector<17x16xf32> to vector<1x16xf32>
    %312 = vector.broadcast %310 : vector<6x1xf32> to vector<6x16xf32>
    %313 = vector.broadcast %311 : vector<1x16xf32> to vector<6x16xf32>
    %314 = arith.mulf %312, %313 : vector<6x16xf32>
    %315 = arith.addf %309, %314 : vector<6x16xf32>
    %316 = vector.extract_strided_slice %234 {offsets = [0, 5], sizes = [6, 1], strides = [1, 1]} : vector<6x8xf32> to vector<6x1xf32>
    %317 = vector.extract_strided_slice %235 {offsets = [13, 0], sizes = [1, 16], strides = [1, 1]} : vector<17x16xf32> to vector<1x16xf32>
    %318 = vector.broadcast %316 : vector<6x1xf32> to vector<6x16xf32>
    %319 = vector.broadcast %317 : vector<1x16xf32> to vector<6x16xf32>
    %320 = arith.mulf %318, %319 : vector<6x16xf32>
    %321 = arith.addf %315, %320 : vector<6x16xf32>
    %322 = vector.extract_strided_slice %234 {offsets = [0, 6], sizes = [6, 1], strides = [1, 1]} : vector<6x8xf32> to vector<6x1xf32>
    %323 = vector.extract_strided_slice %235 {offsets = [14, 0], sizes = [1, 16], strides = [1, 1]} : vector<17x16xf32> to vector<1x16xf32>
    %324 = vector.broadcast %322 : vector<6x1xf32> to vector<6x16xf32>
    %325 = vector.broadcast %323 : vector<1x16xf32> to vector<6x16xf32>
    %326 = arith.mulf %324, %325 : vector<6x16xf32>
    %327 = arith.addf %321, %326 : vector<6x16xf32>
    %328 = vector.extract_strided_slice %234 {offsets = [0, 7], sizes = [6, 1], strides = [1, 1]} : vector<6x8xf32> to vector<6x1xf32>
    %329 = vector.extract_strided_slice %235 {offsets = [15, 0], sizes = [1, 16], strides = [1, 1]} : vector<17x16xf32> to vector<1x16xf32>
    %330 = vector.broadcast %328 : vector<6x1xf32> to vector<6x16xf32>
    %331 = vector.broadcast %329 : vector<1x16xf32> to vector<6x16xf32>
    %332 = arith.mulf %330, %331 : vector<6x16xf32>
    %333 = arith.addf %327, %332 : vector<6x16xf32>
    %c0_43 = arith.constant 0 : index
    %c0_44 = arith.constant 0 : index
    %334 = vector.load %arg3[%c0_43, %c0_44] : memref<6x16xf32, #tpu.memory_space<vmem>>, vector<6x16xf32>
    tpu.vector_store %arg3[%c0_43, %c0_44], %333 {strides = array<i32>} : memref<6x16xf32, #tpu.memory_space<vmem>>, vector<6x16xf32>,
    return
  }
}

</mosaic_0001>

<llo_original>
// kernel: tpu_custom_call.1
$region0: #{tpu_custom_call.1}
  #allocation0 [shape = 'u32[]', space=smem, size = 0x4, offset = 0x4, fixed_abs, tag = 'smem constant byte address 0x4 - core index']
  #allocation1 [shape = 'u32[72,128]{1,0:T(1,128)}', space=vmem, size = 0x9000, scoped, tag = 'internal scratch']
  %s0 = inlined_call_operand.vmem [shape: f32[6,8], index: 0, kind: input, shape index: {}]
  %s1 = inlined_call_operand.vmem [shape: f32[9,48], index: 1, kind: input, shape index: {}]
  %s2 = inlined_call_operand.vmem [shape: f32[17,16], index: 2, kind: input, shape index: {}]
  %s3 = inlined_call_operand.hbm [shape: f32[6,16], index: 3, kind: output, shape index: {}]
  %s4 = sld [smem:[#allocation0]]
  $region22: #{tpu_custom_call.1} parent=0
    _
  %s6 = ssub.s32 1, %s4
  %s7 = scalar_select 0, %s6, %s4
  $region1: #{tpu_custom_call.1} parent=0
    #allocation2 [shape = 'u8[4096]{0}', space=vmem, size = 0x1000, scoped, tag = 'output window, operand 0, single buffered']
    #allocation3 [shape = 's32[1]{0}', space=sflag, size = 0x4, scoped, tag = 'scoped memory for tpu_custom_call.1']
    %8 = vsyncpa [#allocation3], 0
    // Predicated region
    $region2: #{tpu_custom_call.1} parent=1 // pred_check
      _
    $region3: #{tpu_custom_call.1} parent=1 // pred_check_branch
      %10 = sbr.rel (0) target = $region5
    $region4: #{tpu_custom_call.1} parent=1 // pred_region
      _
    $region5: #{tpu_custom_call.1} parent=1 // pred_fallthru
      _
    // Predicated region
    $region6: #{tpu_custom_call.1} parent=1 // pred_check
      _
    $region7: #{tpu_custom_call.1} parent=1 // pred_check_branch
      %12 = sbr.rel (0) target = $region9
    $region8: #{tpu_custom_call.1} parent=1 // pred_region
      _
    $region9: #{tpu_custom_call.1} parent=1 // pred_fallthru
      _
    // Predicated region
    $region10: #{tpu_custom_call.1} parent=1 // pred_check
      _
    $region11: #{tpu_custom_call.1} parent=1 // pred_check_branch
      %14 = sbr.rel (0) target = $region13
    $region12: #{tpu_custom_call.1} parent=1 // pred_region
      _
    $region13: #{tpu_custom_call.1} parent=1 // pred_fallthru
      _
    %v15 = vld [vmem:[%s0] sm:$0x3f]
    %v16 = vld [vmem:[%s1] sm:$0xff]
    %v17 = vld [vmem:[%s1 + $0x8] sm:$0x1]
    %19 = vset.pattern.permute.xlu0 0
    %20 = vperm.xlu0 %19, %v15
    %v21 = vpop.permute.xlu0 %20
    %v23 = vperm.slane %v16, 0
    %v24 = vmul.f32 %v21, %v23
    %v25 = vperm.slane %v17, 0
    %v26 = vadd.f32 %v24, %v25
    %27 = vset.pattern.permute.xlu0 1
    %28 = vperm.xlu0 %27, %v15
    %v29 = vpop.permute.xlu0 %28
    %v31 = vperm.slane %v16, 1
    %v32 = vmul.f32 %v29, %v31
    %v33 = vadd.f32 %v26, %v32
    %34 = vset.pattern.permute.xlu0 2
    %35 = vperm.xlu0 %34, %v15
    %v36 = vpop.permute.xlu0 %35
    %v38 = vperm.slane %v16, 2
    %v39 = vmul.f32 %v36, %v38
    %v40 = vadd.f32 %v33, %v39
    %41 = vset.pattern.permute.xlu0 3
    %42 = vperm.xlu0 %41, %v15
    %v43 = vpop.permute.xlu0 %42
    %v45 = vperm.slane %v16, 3
    %v46 = vmul.f32 %v43, %v45
    %v47 = vadd.f32 %v40, %v46
    %48 = vset.pattern.permute.xlu0 4
    %49 = vperm.xlu0 %48, %v15
    %v50 = vpop.permute.xlu0 %49
    %v52 = vperm.slane %v16, 4
    %v53 = vmul.f32 %v50, %v52
    %v54 = vadd.f32 %v47, %v53
    %55 = vset.pattern.permute.xlu0 5
    %56 = vperm.xlu0 %55, %v15
    %v57 = vpop.permute.xlu0 %56
    %v59 = vperm.slane %v16, 5
    %v60 = vmul.f32 %v57, %v59
    %v61 = vadd.f32 %v54, %v60
    %62 = vset.pattern.permute.xlu0 6
    %63 = vperm.xlu0 %62, %v15
    %v64 = vpop.permute.xlu0 %63
    %v66 = vperm.slane %v16, 6
    %v67 = vmul.f32 %v64, %v66
    %v68 = vadd.f32 %v61, %v67
    %69 = vset.pattern.permute.xlu0 7
    %70 = vperm.xlu0 %69, %v15
    %v71 = vpop.permute.xlu0 %70
    %v73 = vperm.slane %v16, 7
    %v74 = vmul.f32 %v71, %v73
    %v75 = vadd.f32 %v68, %v74
    %v76 = vlaneseq
    %v77 = vshrl.u32 %v76, 7
    %vm78 = vcmp.ge.s32.totalorder %v77, 0
    %vm79 = vcmp.lt.s32.totalorder %v77, 3
    %vm80 = vmand %vm78, %vm79
    %v81 = vperm.slane %v75, 0
    %83 = vrot.lane.b32.xlu0 %v75, 112
    %v84 = vpop.permute.xlu0 %83
    %v86 = vmul.f32 %v81, %v84
    %88 = vrot.lane.b32.xlu0 %v86, 120
    %v89 = vpop.permute.xlu0 %88
    %v91 = vadd.f32 %v86, %v89
    %vm92 = vcmask 62464
    %v93 = vsel %vm92, %v91, -inf
    %v94 = vrot.slane %v93, 4
    %v95 = vmax.f32 %v93, %v94
    %v96 = vrot.slane %v95, 2
    %v97 = vmax.f32 %v95, %v96
    %v98 = vrot.slane %v97, 1
    %v99 = vmax.f32 %v97, %v98
    %v100 = vsub.f32 %v91, %v99
    %v101 = vmul.f32 %v100, 1.442695
    %v102 = vpow.pop %v101
    %v103 = vsel %vm80, %v102, 0.0
    %v104 = vsel %vm92, %v103, 0.0
    %v105 = vrot.slane %v104, 4
    %v106 = vadd.f32 %v104, %v105
    %v107 = vrot.slane %v106, 2
    %v108 = vadd.f32 %v106, %v107
    %v109 = vrot.slane %v108, 1
    %v110 = vadd.f32 %v108, %v109
    %v111 = vrcp.pop %v110
    %v112 = vmul.f32 %v110, %v111
    %v113 = vsub.f32 1.0, %v112
    %v114 = vmul.f32 %v111, %v113
    %v115 = vadd.f32 %v111, %v114
    %vm116 = vweird.f32 %v110
    %vm117 = vweird.f32 %v111
    %vm118 = vmor %vm116, %vm117
    %v119 = vsel %vm118, %v111, %v115
    %v120 = vand.u32 2147483647, %v110
    %vm121 = vcmp.eq.f32.partialorder %v120, 8.507059e+37
    %v122 = vand.u32 %v110, 2147483648
    %v123 = vor.u32 1.1754944e-38, %v122
    %v124 = vsel %vm121, %v123, %v119
    %v125 = vmul.f32 %v103, %v124
    %126 = vrot.lane.b32.xlu0 %v75, 96
    %v127 = vpop.permute.xlu0 %126
    %v129 = vmul.f32 %v125, %v127
    %v130 = vsel %vm92, %v129, 0.0
    %v131 = vrot.slane %v130, 4
    %v132 = vadd.f32 %v130, %v131
    %v133 = vrot.slane %v132, 2
    %v134 = vadd.f32 %v132, %v133
    %v135 = vrot.slane %v134, 1
    %v136 = vadd.f32 %v134, %v135
    %137 = vrot.lane.b32.xlu0 %v75, 88
    %v138 = vpop.permute.xlu0 %137
    %v140 = vmul.f32 %v125, %v138
    %v141 = vsel %vm92, %v140, 0.0
    %v142 = vrot.slane %v141, 4
    %v143 = vadd.f32 %v141, %v142
    %v144 = vrot.slane %v143, 2
    %v145 = vadd.f32 %v143, %v144
    %v146 = vrot.slane %v145, 1
    %v147 = vadd.f32 %v145, %v146
    %v148 = vperm.slane %v75, 1
    %v149 = vmul.f32 %v148, %v84
    %151 = vrot.lane.b32.xlu0 %v149, 120
    %v152 = vpop.permute.xlu0 %151
    %v154 = vadd.f32 %v149, %v152
    %v155 = vsel %vm92, %v154, -inf
    %v156 = vrot.slane %v155, 4
    %v157 = vmax.f32 %v155, %v156
    %v158 = vrot.slane %v157, 2
    %v159 = vmax.f32 %v157, %v158
    %v160 = vrot.slane %v159, 1
    %v161 = vmax.f32 %v159, %v160
    %v162 = vsub.f32 %v154, %v161
    %v163 = vmul.f32 %v162, 1.442695
    %v164 = vpow.pop %v163
    %v165 = vsel %vm80, %v164, 0.0
    %v166 = vsel %vm92, %v165, 0.0
    %v167 = vrot.slane %v166, 4
    %v168 = vadd.f32 %v166, %v167
    %v169 = vrot.slane %v168, 2
    %v170 = vadd.f32 %v168, %v169
    %v171 = vrot.slane %v170, 1
    %v172 = vadd.f32 %v170, %v171
    %v173 = vrcp.pop %v172
    %v174 = vmul.f32 %v172, %v173
    %v175 = vsub.f32 1.0, %v174
    %v176 = vmul.f32 %v173, %v175
    %v177 = vadd.f32 %v173, %v176
    %vm178 = vweird.f32 %v172
    %vm179 = vweird.f32 %v173
    %vm180 = vmor %vm178, %vm179
    %v181 = vsel %vm180, %v173, %v177
    %v182 = vand.u32 2147483647, %v172
    %vm183 = vcmp.eq.f32.partialorder %v182, 8.507059e+37
    %v184 = vand.u32 %v172, 2147483648
    %v185 = vor.u32 1.1754944e-38, %v184
    %v186 = vsel %vm183, %v185, %v181
    %v187 = vmul.f32 %v165, %v186
    %v188 = vmul.f32 %v187, %v127
    %v189 = vsel %vm92, %v188, 0.0
    %v190 = vrot.slane %v189, 4
    %v191 = vadd.f32 %v189, %v190
    %v192 = vrot.slane %v191, 2
    %v193 = vadd.f32 %v191, %v192
    %v194 = vrot.slane %v193, 1
    %v195 = vadd.f32 %v193, %v194
    %v196 = vmul.f32 %v187, %v138
    %v197 = vsel %vm92, %v196, 0.0
    %v198 = vrot.slane %v197, 4
    %v199 = vadd.f32 %v197, %v198
    %v200 = vrot.slane %v199, 2
    %v201 = vadd.f32 %v199, %v200
    %v202 = vrot.slane %v201, 1
    %v203 = vadd.f32 %v201, %v202
    %v204 = vperm.slane %v75, 2
    %v205 = vmul.f32 %v204, %v84
    %207 = vrot.lane.b32.xlu0 %v205, 120
    %v208 = vpop.permute.xlu0 %207
    %v210 = vadd.f32 %v205, %v208
    %v211 = vsel %vm92, %v210, -inf
    %v212 = vrot.slane %v211, 4
    %v213 = vmax.f32 %v211, %v212
    %v214 = vrot.slane %v213, 2
    %v215 = vmax.f32 %v213, %v214
    %v216 = vrot.slane %v215, 1
    %v217 = vmax.f32 %v215, %v216
    %v218 = vsub.f32 %v210, %v217
    %v219 = vmul.f32 %v218, 1.442695
    %v220 = vpow.pop %v219
    %v221 = vsel %vm80, %v220, 0.0
    %v222 = vsel %vm92, %v221, 0.0
    %v223 = vrot.slane %v222, 4
    %v224 = vadd.f32 %v222, %v223
    %v225 = vrot.slane %v224, 2
    %v226 = vadd.f32 %v224, %v225
    %v227 = vrot.slane %v226, 1
    %v228 = vadd.f32 %v226, %v227
    %v229 = vrcp.pop %v228
    %v230 = vmul.f32 %v228, %v229
    %v231 = vsub.f32 1.0, %v230
    %v232 = vmul.f32 %v229, %v231
    %v233 = vadd.f32 %v229, %v232
    %vm234 = vweird.f32 %v228
    %vm235 = vweird.f32 %v229
    %vm236 = vmor %vm234, %vm235
    %v237 = vsel %vm236, %v229, %v233
    %v238 = vand.u32 2147483647, %v228
    %vm239 = vcmp.eq.f32.partialorder %v238, 8.507059e+37
    %v240 = vand.u32 %v228, 2147483648
    %v241 = vor.u32 1.1754944e-38, %v240
    %v242 = vsel %vm239, %v241, %v237
    %v243 = vmul.f32 %v221, %v242
    %v244 = vmul.f32 %v243, %v127
    %v245 = vsel %vm92, %v244, 0.0
    %v246 = vrot.slane %v245, 4
    %v247 = vadd.f32 %v245, %v246
    %v248 = vrot.slane %v247, 2
    %v249 = vadd.f32 %v247, %v248
    %v250 = vrot.slane %v249, 1
    %v251 = vadd.f32 %v249, %v250
    %v252 = vmul.f32 %v243, %v138
    %v253 = vsel %vm92, %v252, 0.0
    %v254 = vrot.slane %v253, 4
    %v255 = vadd.f32 %v253, %v254
    %v256 = vrot.slane %v255, 2
    %v257 = vadd.f32 %v255, %v256
    %v258 = vrot.slane %v257, 1
    %v259 = vadd.f32 %v257, %v258
    %vm260 = vcmp.ge.s32.totalorder %v77, 3
    %vm261 = vcmp.lt.s32.totalorder %v77, 6
    %vm262 = vmand %vm260, %vm261
    %v263 = vperm.slane %v75, 3
    %v264 = vmul.f32 %v263, %v84
    %266 = vrot.lane.b32.xlu0 %v264, 120
    %v267 = vpop.permute.xlu0 %266
    %v269 = vadd.f32 %v264, %v267
    %v270 = vsel %vm92, %v269, -inf
    %v271 = vrot.slane %v270, 4
    %v272 = vmax.f32 %v270, %v271
    %v273 = vrot.slane %v272, 2
    %v274 = vmax.f32 %v272, %v273
    %v275 = vrot.slane %v274, 1
    %v276 = vmax.f32 %v274, %v275
    %v277 = vsub.f32 %v269, %v276
    %v278 = vmul.f32 %v277, 1.442695
    %v279 = vpow.pop %v278
    %v280 = vsel %vm262, %v279, 0.0
    %v281 = vsel %vm92, %v280, 0.0
    %v282 = vrot.slane %v281, 4
    %v283 = vadd.f32 %v281, %v282
    %v284 = vrot.slane %v283, 2
    %v285 = vadd.f32 %v283, %v284
    %v286 = vrot.slane %v285, 1
    %v287 = vadd.f32 %v285, %v286
    %v288 = vrcp.pop %v287
    %v289 = vmul.f32 %v287, %v288
    %v290 = vsub.f32 1.0, %v289
    %v291 = vmul.f32 %v288, %v290
    %v292 = vadd.f32 %v288, %v291
    %vm293 = vweird.f32 %v287
    %vm294 = vweird.f32 %v288
    %vm295 = vmor %vm293, %vm294
    %v296 = vsel %vm295, %v288, %v292
    %v297 = vand.u32 2147483647, %v287
    %vm298 = vcmp.eq.f32.partialorder %v297, 8.507059e+37
    %v299 = vand.u32 %v287, 2147483648
    %v300 = vor.u32 1.1754944e-38, %v299
    %v301 = vsel %vm298, %v300, %v296
    %v302 = vmul.f32 %v280, %v301
    %v303 = vmul.f32 %v302, %v127
    %v304 = vsel %vm92, %v303, 0.0
    %v305 = vrot.slane %v304, 4
    %v306 = vadd.f32 %v304, %v305
    %v307 = vrot.slane %v306, 2
    %v308 = vadd.f32 %v306, %v307
    %v309 = vrot.slane %v308, 1
    %v310 = vadd.f32 %v308, %v309
    %v311 = vmul.f32 %v302, %v138
    %v312 = vsel %vm92, %v311, 0.0
    %v313 = vrot.slane %v312, 4
    %v314 = vadd.f32 %v312, %v313
    %v315 = vrot.slane %v314, 2
    %v316 = vadd.f32 %v314, %v315
    %v317 = vrot.slane %v316, 1
    %v318 = vadd.f32 %v316, %v317
    %v319 = vperm.slane %v75, 4
    %v320 = vmul.f32 %v319, %v84
    %322 = vrot.lane.b32.xlu0 %v320, 120
    %v323 = vpop.permute.xlu0 %322
    %v325 = vadd.f32 %v320, %v323
    %v326 = vsel %vm92, %v325, -inf
    %v327 = vrot.slane %v326, 4
    %v328 = vmax.f32 %v326, %v327
    %v329 = vrot.slane %v328, 2
    %v330 = vmax.f32 %v328, %v329
    %v331 = vrot.slane %v330, 1
    %v332 = vmax.f32 %v330, %v331
    %v333 = vsub.f32 %v325, %v332
    %v334 = vmul.f32 %v333, 1.442695
    %v335 = vpow.pop %v334
    %v336 = vsel %vm262, %v335, 0.0
    %v337 = vsel %vm92, %v336, 0.0
    %v338 = vrot.slane %v337, 4
    %v339 = vadd.f32 %v337, %v338
    %v340 = vrot.slane %v339, 2
    %v341 = vadd.f32 %v339, %v340
    %v342 = vrot.slane %v341, 1
    %v343 = vadd.f32 %v341, %v342
    %v344 = vrcp.pop %v343
    %v345 = vmul.f32 %v343, %v344
    %v346 = vsub.f32 1.0, %v345
    %v347 = vmul.f32 %v344, %v346
    %v348 = vadd.f32 %v344, %v347
    %vm349 = vweird.f32 %v343
    %vm350 = vweird.f32 %v344
    %vm351 = vmor %vm349, %vm350
    %v352 = vsel %vm351, %v344, %v348
    %v353 = vand.u32 2147483647, %v343
    %vm354 = vcmp.eq.f32.partialorder %v353, 8.507059e+37
    %v355 = vand.u32 %v343, 2147483648
    %v356 = vor.u32 1.1754944e-38, %v355
    %v357 = vsel %vm354, %v356, %v352
    %v358 = vmul.f32 %v336, %v357
    %v359 = vmul.f32 %v358, %v127
    %v360 = vsel %vm92, %v359, 0.0
    %v361 = vrot.slane %v360, 4
    %v362 = vadd.f32 %v360, %v361
    %v363 = vrot.slane %v362, 2
    %v364 = vadd.f32 %v362, %v363
    %v365 = vrot.slane %v364, 1
    %v366 = vadd.f32 %v364, %v365
    %v367 = vmul.f32 %v358, %v138
    %v368 = vsel %vm92, %v367, 0.0
    %v369 = vrot.slane %v368, 4
    %v370 = vadd.f32 %v368, %v369
    %v371 = vrot.slane %v370, 2
    %v372 = vadd.f32 %v370, %v371
    %v373 = vrot.slane %v372, 1
    %v374 = vadd.f32 %v372, %v373
    %v375 = vperm.slane %v75, 5
    %v376 = vmul.f32 %v375, %v84
    %378 = vrot.lane.b32.xlu0 %v376, 120
    %v379 = vpop.permute.xlu0 %378
    %v381 = vadd.f32 %v376, %v379
    %v382 = vsel %vm92, %v381, -inf
    %v383 = vrot.slane %v382, 4
    %v384 = vmax.f32 %v382, %v383
    %v385 = vrot.slane %v384, 2
    %v386 = vmax.f32 %v384, %v385
    %v387 = vrot.slane %v386, 1
    %v388 = vmax.f32 %v386, %v387
    %v389 = vsub.f32 %v381, %v388
    %v390 = vmul.f32 %v389, 1.442695
    %v391 = vpow.pop %v390
    %v392 = vsel %vm262, %v391, 0.0
    %v393 = vsel %vm92, %v392, 0.0
    %v394 = vrot.slane %v393, 4
    %v395 = vadd.f32 %v393, %v394
    %v396 = vrot.slane %v395, 2
    %v397 = vadd.f32 %v395, %v396
    %v398 = vrot.slane %v397, 1
    %v399 = vadd.f32 %v397, %v398
    %v400 = vrcp.pop %v399
    %v401 = vmul.f32 %v399, %v400
    %v402 = vsub.f32 1.0, %v401
    %v403 = vmul.f32 %v400, %v402
    %v404 = vadd.f32 %v400, %v403
    %vm405 = vweird.f32 %v399
    %vm406 = vweird.f32 %v400
    %vm407 = vmor %vm405, %vm406
    %v408 = vsel %vm407, %v400, %v404
    %v409 = vand.u32 2147483647, %v399
    %vm410 = vcmp.eq.f32.partialorder %v409, 8.507059e+37
    %v411 = vand.u32 %v399, 2147483648
    %v412 = vor.u32 1.1754944e-38, %v411
    %v413 = vsel %vm410, %v412, %v408
    %v414 = vmul.f32 %v392, %v413
    %v415 = vmul.f32 %v414, %v127
    %v416 = vsel %vm92, %v415, 0.0
    %v417 = vrot.slane %v416, 4
    %v418 = vadd.f32 %v416, %v417
    %v419 = vrot.slane %v418, 2
    %v420 = vadd.f32 %v418, %v419
    %v421 = vrot.slane %v420, 1
    %v422 = vadd.f32 %v420, %v421
    %v423 = vmul.f32 %v414, %v138
    %v424 = vsel %vm92, %v423, 0.0
    %v425 = vrot.slane %v424, 4
    %v426 = vadd.f32 %v424, %v425
    %v427 = vrot.slane %v426, 2
    %v428 = vadd.f32 %v426, %v427
    %v429 = vrot.slane %v428, 1
    %v430 = vadd.f32 %v428, %v429
    %vm431 = vcmask 1040384
    %v432 = vsel %vm431, %v136, %v195
    %vm433 = vcmask 1041408
    %v434 = vsel %vm433, %v432, %v251
    %vm435 = vcmask 1042432
    %v436 = vsel %vm435, %v434, %v310
    %vm437 = vcmask 1043456
    %v438 = vsel %vm437, %v436, %v366
    %vm439 = vcmask 1044480
    %v440 = vsel %vm439, %v438, %v422
    %v441 = vsel %vm431, %v147, %v203
    %v442 = vsel %vm433, %v441, %v259
    %v443 = vsel %vm435, %v442, %v318
    %v444 = vsel %vm437, %v443, %v374
    %v445 = vsel %vm439, %v444, %v430
    %v446 = vld [vmem:[%s2] sm:$0xff]
    %v447 = vld [vmem:[%s2 + $0x8] sm:$0xff]
    %v448 = vld [vmem:[%s2 + $0x10] sm:$0x1]
    %450 = vset.pattern.permute.xlu0 0
    %451 = vperm.xlu0 %450, %v440
    %v452 = vpop.permute.xlu0 %451
    %v454 = vperm.slane %v446, 0
    %v455 = vmul.f32 %v452, %v454
    %v456 = vperm.slane %v448, 0
    %v457 = vadd.f32 %v456, %v455
    %458 = vset.pattern.permute.xlu0 1
    %459 = vperm.xlu0 %458, %v440
    %v460 = vpop.permute.xlu0 %459
    %v462 = vperm.slane %v446, 1
    %v463 = vmul.f32 %v460, %v462
    %v464 = vadd.f32 %v457, %v463
    %465 = vset.pattern.permute.xlu0 2
    %466 = vperm.xlu0 %465, %v440
    %v467 = vpop.permute.xlu0 %466
    %v469 = vperm.slane %v446, 2
    %v470 = vmul.f32 %v467, %v469
    %v471 = vadd.f32 %v464, %v470
    %472 = vset.pattern.permute.xlu0 3
    %473 = vperm.xlu0 %472, %v440
    %v474 = vpop.permute.xlu0 %473
    %v476 = vperm.slane %v446, 3
    %v477 = vmul.f32 %v474, %v476
    %v478 = vadd.f32 %v471, %v477
    %479 = vset.pattern.permute.xlu0 4
    %480 = vperm.xlu0 %479, %v440
    %v481 = vpop.permute.xlu0 %480
    %v483 = vperm.slane %v446, 4
    %v484 = vmul.f32 %v481, %v483
    %v485 = vadd.f32 %v478, %v484
    %486 = vset.pattern.permute.xlu0 5
    %487 = vperm.xlu0 %486, %v440
    %v488 = vpop.permute.xlu0 %487
    %v490 = vperm.slane %v446, 5
    %v491 = vmul.f32 %v488, %v490
    %v492 = vadd.f32 %v485, %v491
    %493 = vset.pattern.permute.xlu0 6
    %494 = vperm.xlu0 %493, %v440
    %v495 = vpop.permute.xlu0 %494
    %v497 = vperm.slane %v446, 6
    %v498 = vmul.f32 %v495, %v497
    %v499 = vadd.f32 %v492, %v498
    %500 = vset.pattern.permute.xlu0 7
    %501 = vperm.xlu0 %500, %v440
    %v502 = vpop.permute.xlu0 %501
    %v504 = vperm.slane %v446, 7
    %v505 = vmul.f32 %v502, %v504
    %v506 = vadd.f32 %v499, %v505
    %508 = vset.pattern.permute.xlu0 0
    %509 = vperm.xlu0 %508, %v445
    %v510 = vpop.permute.xlu0 %509
    %v512 = vperm.slane %v447, 0
    %v513 = vmul.f32 %v510, %v512
    %v514 = vadd.f32 %v506, %v513
    %515 = vset.pattern.permute.xlu0 1
    %516 = vperm.xlu0 %515, %v445
    %v517 = vpop.permute.xlu0 %516
    %v519 = vperm.slane %v447, 1
    %v520 = vmul.f32 %v517, %v519
    %v521 = vadd.f32 %v514, %v520
    %522 = vset.pattern.permute.xlu0 2
    %523 = vperm.xlu0 %522, %v445
    %v524 = vpop.permute.xlu0 %523
    %v526 = vperm.slane %v447, 2
    %v527 = vmul.f32 %v524, %v526
    %v528 = vadd.f32 %v521, %v527
    %529 = vset.pattern.permute.xlu0 3
    %530 = vperm.xlu0 %529, %v445
    %v531 = vpop.permute.xlu0 %530
    %v533 = vperm.slane %v447, 3
    %v534 = vmul.f32 %v531, %v533
    %v535 = vadd.f32 %v528, %v534
    %536 = vset.pattern.permute.xlu0 4
    %537 = vperm.xlu0 %536, %v445
    %v538 = vpop.permute.xlu0 %537
    %v540 = vperm.slane %v447, 4
    %v541 = vmul.f32 %v538, %v540
    %v542 = vadd.f32 %v535, %v541
    %543 = vset.pattern.permute.xlu0 5
    %544 = vperm.xlu0 %543, %v445
    %v545 = vpop.permute.xlu0 %544
    %v547 = vperm.slane %v447, 5
    %v548 = vmul.f32 %v545, %v547
    %v549 = vadd.f32 %v542, %v548
    %550 = vset.pattern.permute.xlu0 6
    %551 = vperm.xlu0 %550, %v445
    %v552 = vpop.permute.xlu0 %551
    %v554 = vperm.slane %v447, 6
    %v555 = vmul.f32 %v552, %v554
    %v556 = vadd.f32 %v549, %v555
    %557 = vset.pattern.permute.xlu0 7
    %558 = vperm.xlu0 %557, %v445
    %v559 = vpop.permute.xlu0 %558
    %v561 = vperm.slane %v447, 7
    %v562 = vmul.f32 %v559, %v561
    %v563 = vadd.f32 %v556, %v562
    %vm564 = vcmask 128000
    %565 = vst.msk [vmem:[#allocation2] sm:$0x3f] %vm564, %v563
    // Predicated region
    $region14: #{tpu_custom_call.1} parent=1 // pred_check
      _
    $region15: #{tpu_custom_call.1} parent=1 // pred_check_branch
      %567 = sbr.rel (0) target = $region17
    $region16: #{tpu_custom_call.1} parent=1 // pred_region
      %569 = vsyncadd [#allocation3], 0
      %s571 = sshll.u32 [#allocation2], 4
      %s572 = int_to_ptr.vmem [resolvable:$true] %s571
      %s573 = sshll.u32 %s3, 4
      %s574 = int_to_ptr.hbm [resolvable:$true] %s573
      %576 = dma.vmem_to_hbm [thread:$0]  %s572, 128, %s574, [#allocation3]
    $region17: #{tpu_custom_call.1} parent=1 // pred_fallthru
      _
    // Predicated region
    $region18: #{tpu_custom_call.1} parent=1 // pred_check
      _
    $region19: #{tpu_custom_call.1} parent=1 // pred_check_branch
      %578 = sbr.rel (0) target = $region21
    $region20: #{tpu_custom_call.1} parent=1 // pred_region
      %580 = dma.done [#allocation3], 128
    $region21: #{tpu_custom_call.1} parent=1 // pred_fallthru
      _
    %581 = vsyncpa [#allocation3], 1

</llo_original>
